<compile_context>
chip_gen: v7x
topology: tpu7x:2x2x1
jax: 0.10.0
libtpu: 0.0.40
codegen_flags: <defaults>
</compile_context>

<pallas_src>
import functools

import jax
import jax.numpy as jnp
from jax.experimental import pallas as pl
from jax.experimental.pallas import tpu as pltpu


def _round_up(x, m):
    return (x + m - 1) // m * m


def _vmem_block_bytes(block_shape, itemsize):
    """Physical VMEM footprint of one pipeline buffer, with (sublane, 128) tiling."""
    sub_tile = max(8, 32 // itemsize)          # 8 for f32, 16 for bf16, 32 for int8
    if len(block_shape) == 1:
        lead, sub, lane = 1, 1, block_shape[0]
    else:
        lead = 1
        for d in block_shape[:-2]:
            lead *= d
        sub, lane = block_shape[-2], block_shape[-1]
    return lead * _round_up(sub, sub_tile) * _round_up(lane, 128) * itemsize


def _vmem_capacity_bytes():
    try:
        return int(pltpu.get_tpu_info().vmem_capacity_bytes)
    except Exception:
        return 64 << 20   # conservative (v7x-sized) fallback


def _kernel_lane_prefix(x_ref, o_ref, *, c):
    # x_ref: (th, 1, w_out, factor*c) -- only the kept H rows (H-factor block = 1).
    # o_ref: (th, w_out, c)
    # W stride is a static, contiguous lane-prefix slice of each factor*c group.
    o_ref[...] = x_ref[:, 0, :, :c]


def _kernel_strided_w(x_ref, o_ref):
    # x_ref: (th, 1, w_out, 1, c//128, 128) -- only kept H rows AND kept W cols
    #        (both factor axes: block = 1, index 0 -> stride handled by the DMA).
    # o_ref: (th, w_out, c//128, 128)
    o_ref[...] = x_ref[:, 0, :, 0, :, :]


def downscale(x, factor, *, block_rows=None):
    """Pallas TPU equivalent of x[:, ::factor, ::factor, :] for NHWC input."""
    n, h, w, c = x.shape
    if factor == 1:
        return x

    dsize = x.dtype.itemsize
    h_out = -(-h // factor)
    w_out = -(-w // factor)

    # Pad H/W up to a multiple of `factor` only when needed; padded rows/cols are
    # never selected (last kept index is <= h-1 / w-1).
    pad_h = h_out * factor - h
    pad_w = w_out * factor - w
    if pad_h or pad_w:
        # TODO(synk): avoid this full-tensor copy by handling the ragged last kept
        # row/column separately from the divisible interior.
        x = jnp.pad(x, ((0, 0), (0, pad_h), (0, pad_w), (0, 0)))

    rows = n * h_out  # flattened (batch, kept-H-row) output rows

    # Path selection: push the W stride into the DMA only when the per-chunk HBM
    # read (c * itemsize) is big enough for efficient bursts and c splits cleanly
    # into full 128-lane tiles (keeps every BlockSpec dim full-extent / leading).
    dma_w_stride = (c % 128 == 0) and (c * dsize >= 512)

    if dma_w_stride:
        cd = c // 128
        x_r = x.reshape(rows, factor, w_out, factor, cd, 128)      # free relabel
        in_block = lambda th: (th, 1, w_out, 1, cd, 128)
        in_map = lambda i: (i, 0, 0, 0, 0, 0)
        out_arr_shape = (rows, w_out, cd, 128)
        out_block = lambda th: (th, w_out, cd, 128)
        out_map = lambda i: (i, 0, 0, 0)
        kernel = _kernel_strided_w
        bytes_read = rows * w_out * c * dsize                      # kept cols only
    else:
        x_r = x.reshape(rows, factor, w_out, factor * c)           # free relabel
        in_block = lambda th: (th, 1, w_out, factor * c)
        in_map = lambda i: (i, 0, 0, 0)
        out_arr_shape = (rows, w_out, c)
        out_block = lambda th: (th, w_out, c)
        out_map = lambda i: (i, 0, 0)
        kernel = functools.partial(_kernel_lane_prefix, c=c)
        bytes_read = rows * w_out * factor * c * dsize             # all W of kept rows
    bytes_written = rows * w_out * c * dsize

    # --- Generation-aware VMEM budget & tile sizing ---
    vmem_cap = _vmem_capacity_bytes()
    vmem_limit = min(vmem_cap * 3 // 4, 96 << 20)     # v5e/v6e: 96 MiB, v7x: 48 MiB
    block_budget = min(vmem_limit // 3, 24 << 20)     # in+out per block; 2x-buffered fits

    in_row = _vmem_block_bytes(in_block(1), dsize)
    out_row = _vmem_block_bytes(out_block(1), dsize)
    row_bytes = in_row + out_row

    if block_rows is not None:
        th = max(1, min(rows, int(block_rows)))
    else:
        th_budget = max(1, block_budget // row_bytes)
        # ~8 grid steps (>=2 per v7x core + read/writeback overlap), but keep each
        # block >= ~1 MiB so per-step overhead stays negligible on small inputs.
        min_rows = max(1, (1 << 20) // row_bytes)
        th = max(1, min(rows, th_budget, max(min_rows, pl.cdiv(rows, 8))))

    out_flat = pl.pallas_call(
        kernel,
        out_shape=jax.ShapeDtypeStruct(out_arr_shape, x.dtype),
        grid_spec=pltpu.PrefetchScalarGridSpec(
            num_scalar_prefetch=0,
            grid=(pl.cdiv(rows, th),),
            in_specs=[pl.BlockSpec(in_block(th), in_map)],
            out_specs=pl.BlockSpec(out_block(th), out_map),
        ),
        compiler_params=pltpu.CompilerParams(
            dimension_semantics=("parallel",),
            vmem_limit_bytes=int(vmem_limit),
        ),
        cost_estimate=pl.CostEstimate(
            flops=0, transcendentals=0,
            bytes_accessed=int(bytes_read + bytes_written)),
    )(x_r)

    return out_flat.reshape(n, h_out, w_out, c)


if __name__ == "__main__":
    key = jax.random.PRNGKey(0)

    # Test 1: small C (lane-prefix path), shapes divisible by the factor.
    x1 = jax.random.normal(key, (2, 16, 16, 8), dtype=jnp.float32)
    r1 = x1[:, ::2, ::2, :]
    o1 = jax.block_until_ready(downscale(x1, 2))
    assert o1.shape == r1.shape, (o1.shape, r1.shape)
    assert jnp.array_equal(o1, r1), "mismatch (test 1: small C, divisible)"

    # Test 2: H not a multiple of the factor (padding path), small C.
    x2 = jax.random.normal(jax.random.PRNGKey(1), (2, 16, 15, 4), dtype=jnp.float32)
    r2 = x2[:, ::3, ::3, :]
    o2 = jax.block_until_ready(downscale(x2, 3))
    assert o2.shape == r2.shape, (o2.shape, r2.shape)
    assert jnp.array_equal(o2, r2), "mismatch (test 2: ragged H)"

    # Test 3: large C (DMA-strided-W path), fp32 C=128.
    x3 = jax.random.normal(jax.random.PRNGKey(2), (2, 8, 8, 128), dtype=jnp.float32)
    r3 = x3[:, ::2, ::2, :]
    o3 = jax.block_until_ready(downscale(x3, 2))
    assert o3.shape == r3.shape, (o3.shape, r3.shape)
    assert jnp.array_equal(o3, r3), "mismatch (test 3: large C strided-W)"

    # Test 4: partial final grid block (rows % block_rows != 0) on both paths.
    o4 = jax.block_until_ready(downscale(x1, 2, block_rows=3))
    assert jnp.array_equal(o4, r1), "mismatch (test 4a: edge block, lane-prefix)"
    o5 = jax.block_until_ready(downscale(x3, 2, block_rows=3))
    assert jnp.array_equal(o5, r3), "mismatch (test 4b: edge block, strided-W)"

    # Test 5: bf16, large C (exercises the itemsize-aware path gate).
    x6 = jax.random.normal(jax.random.PRNGKey(3), (2, 8, 8, 256), dtype=jnp.bfloat16)
    r6 = x6[:, ::2, ::2, :]
    o6 = jax.block_until_ready(downscale(x6, 2))
    assert o6.shape == r6.shape, (o6.shape, r6.shape)
    assert jnp.array_equal(o6, r6), "mismatch (test 5: bf16 large C)"

    print("KERNEL_OK")
</pallas_src>

<mosaic_0001>
module attributes {stable_mosaic.version = 11 : i64} {
  func.func @_kernel_lane_prefix(%arg0: i32, %arg1: memref<16x1x8x16xf32, #tpu.memory_space<vmem>>, %arg2: memref<16x8x8xf32, #tpu.memory_space<vmem>>) attributes {dimension_semantics = [#tpu.dimension_semantics<parallel>], iteration_bounds = array<i64: 1>, scalar_prefetch = 0 : i64, scratch_operands = 0 : i64, tpu.core_type = #tpu.core_type<tc>, window_params = [{transform_indices = @transform_0, window_bounds = array<i64: 16, 1, 8, 16>}, {transform_indices = @transform_1, window_bounds = array<i64: 16, 8, 8>}]} {
    %c0 = arith.constant 0 : index
    %c0_0 = arith.constant 0 : index
    %c0_1 = arith.constant 0 : index
    %c0_2 = arith.constant 0 : index
    %0 = vector.load %arg1[%c0, %c0_0, %c0_1, %c0_2] : memref<16x1x8x16xf32, #tpu.memory_space<vmem>>, vector<16x1x8x8xf32>
    %1 = vector.shape_cast %0 : vector<16x1x8x8xf32> to vector<16x8x8xf32>
    %c0_3 = arith.constant 0 : index
    %c0_4 = arith.constant 0 : index
    %c0_5 = arith.constant 0 : index
    %2 = vector.load %arg2[%c0_3, %c0_4, %c0_5] : memref<16x8x8xf32, #tpu.memory_space<vmem>>, vector<16x8x8xf32>
    tpu.vector_store %arg2[%c0_3, %c0_4, %c0_5], %1 {strides = array<i32>} : memref<16x8x8xf32, #tpu.memory_space<vmem>>, vector<16x8x8xf32>,
    return
  }
  func.func @transform_0(%arg0: i32) -> (i32, i32, i32, i32) {
    %c0_i32 = arith.constant 0 : i32
    %c0_i32_0 = arith.constant 0 : i32
    %c0_i32_1 = arith.constant 0 : i32
    %c0_i32_2 = arith.constant 0 : i32
    return %arg0, %c0_i32, %c0_i32_0, %c0_i32_1 : i32, i32, i32, i32
  }
  func.func @transform_1(%arg0: i32) -> (i32, i32, i32) {
    %c0_i32 = arith.constant 0 : i32
    %c0_i32_0 = arith.constant 0 : i32
    %c0_i32_1 = arith.constant 0 : i32
    return %arg0, %c0_i32, %c0_i32_0 : i32, i32, i32
  }
}

</mosaic_0001>

<llo_original>
// kernel: tpu_custom_call.1
$region0: #{tpu_custom_call.1}
  #allocation0 [shape = 'u32[]', space=smem, size = 0x4, offset = 0x4, fixed_abs, tag = 'smem constant byte address 0x4 - core index']
  #allocation1 [shape = 'u32[144,128]{1,0:T(1,128)}', space=vmem, size = 0x12000, scoped, tag = 'internal scratch']
  %s0 = inlined_call_operand.hbm [shape: f32[16,2,8,16], index: 0, kind: input, shape index: {}]
  %s1 = inlined_call_operand.vmem [shape: f32[16,8,8], index: 1, kind: output, shape index: {}]
  %s2 = sld [smem:[#allocation0]]
  $region18: #{tpu_custom_call.1} parent=0
    _
  %s4 = ssub.s32 1, %s2
  %s5 = scalar_select 0, %s4, %s2
  $region1: #{tpu_custom_call.1} parent=0
    #allocation2 [shape = 'u8[65536]{0}', space=vmem, size = 0x10000, scoped, tag = 'input window, operand 0, single buffered']
    #allocation3 [shape = 's32[1]{0}', space=sflag, size = 0x4, scoped, tag = 'scoped memory for tpu_custom_call.1']
    %6 = vsyncpa [#allocation3], 0
    // Predicated region
    $region2: #{tpu_custom_call.1} parent=1 // pred_check
      _
    $region3: #{tpu_custom_call.1} parent=1 // pred_check_branch
      %8 = sbr.rel (0) target = $region5
    $region4: #{tpu_custom_call.1} parent=1 // pred_region
      %s10 = ssub.s32 2048, 2048
      %11 = vsyncadd [#allocation3], %s10
      %s12 = sshll.u32 [#allocation2], 4
      %s13 = int_to_ptr.vmem [resolvable:$true] %s12
      %18 = dma.hbm_to_vmem [thread:$0]  %s0, 2048, %s13, [#allocation3], 256, 128, 8
    $region5: #{tpu_custom_call.1} parent=1 // pred_fallthru
      _
    // Predicated region
    $region6: #{tpu_custom_call.1} parent=1 // pred_check
      _
    $region7: #{tpu_custom_call.1} parent=1 // pred_check_branch
      %20 = sbr.rel (0) target = $region9
    $region8: #{tpu_custom_call.1} parent=1 // pred_region
      %21 = dma.done [#allocation3], 2048
    $region9: #{tpu_custom_call.1} parent=1 // pred_fallthru
      _
    %v22 = vld [vmem:[#allocation2] sm:$0xff]
    %v23 = vld [vmem:[#allocation2 + $0x8] sm:$0xff]
    %v24 = vld [vmem:[#allocation2 + $0x10] sm:$0xff]
    %v25 = vld [vmem:[#allocation2 + $0x18] sm:$0xff]
    %v26 = vld [vmem:[#allocation2 + $0x20] sm:$0xff]
    %v27 = vld [vmem:[#allocation2 + $0x28] sm:$0xff]
    %v28 = vld [vmem:[#allocation2 + $0x30] sm:$0xff]
    %v29 = vld [vmem:[#allocation2 + $0x38] sm:$0xff]
    %v30 = vld [vmem:[#allocation2 + $0x40] sm:$0xff]
    %v31 = vld [vmem:[#allocation2 + $0x48] sm:$0xff]
    %v32 = vld [vmem:[#allocation2 + $0x50] sm:$0xff]
    %v33 = vld [vmem:[#allocation2 + $0x58] sm:$0xff]
    %v34 = vld [vmem:[#allocation2 + $0x60] sm:$0xff]
    %v35 = vld [vmem:[#allocation2 + $0x68] sm:$0xff]
    %v36 = vld [vmem:[#allocation2 + $0x70] sm:$0xff]
    %v37 = vld [vmem:[#allocation2 + $0x78] sm:$0xff]
    %vm38 = vcmask 64512
    %39 = vst.msk [vmem:[%s1] sm:$0xff] %vm38, %v22
    %40 = vst.msk [vmem:[%s1 + $0x8] sm:$0xff] %vm38, %v23
    %41 = vst.msk [vmem:[%s1 + $0x10] sm:$0xff] %vm38, %v24
    %42 = vst.msk [vmem:[%s1 + $0x18] sm:$0xff] %vm38, %v25
    %43 = vst.msk [vmem:[%s1 + $0x20] sm:$0xff] %vm38, %v26
    %44 = vst.msk [vmem:[%s1 + $0x28] sm:$0xff] %vm38, %v27
    %45 = vst.msk [vmem:[%s1 + $0x30] sm:$0xff] %vm38, %v28
    %46 = vst.msk [vmem:[%s1 + $0x38] sm:$0xff] %vm38, %v29
    %47 = vst.msk [vmem:[%s1 + $0x40] sm:$0xff] %vm38, %v30
    %48 = vst.msk [vmem:[%s1 + $0x48] sm:$0xff] %vm38, %v31
    %49 = vst.msk [vmem:[%s1 + $0x50] sm:$0xff] %vm38, %v32
    %50 = vst.msk [vmem:[%s1 + $0x58] sm:$0xff] %vm38, %v33
    %51 = vst.msk [vmem:[%s1 + $0x60] sm:$0xff] %vm38, %v34
    %52 = vst.msk [vmem:[%s1 + $0x68] sm:$0xff] %vm38, %v35
    %53 = vst.msk [vmem:[%s1 + $0x70] sm:$0xff] %vm38, %v36
    %54 = vst.msk [vmem:[%s1 + $0x78] sm:$0xff] %vm38, %v37
    // Predicated region
    $region10: #{tpu_custom_call.1} parent=1 // pred_check
      _
    $region11: #{tpu_custom_call.1} parent=1 // pred_check_branch
      %56 = sbr.rel (0) target = $region13
    $region12: #{tpu_custom_call.1} parent=1 // pred_region
      _
    $region13: #{tpu_custom_call.1} parent=1 // pred_fallthru
      _
    // Predicated region
    $region14: #{tpu_custom_call.1} parent=1 // pred_check
      _
    $region15: #{tpu_custom_call.1} parent=1 // pred_check_branch
      %58 = sbr.rel (0) target = $region17
    $region16: #{tpu_custom_call.1} parent=1 // pred_region
      _
    $region17: #{tpu_custom_call.1} parent=1 // pred_fallthru
      _
    %59 = vsyncpa [#allocation3], 1

</llo_original>
